<compile_context>
chip_gen: v7x
topology: tpu7x:2x2x1
jax: 0.10.0
libtpu: 0.0.40
codegen_flags: <defaults>
</compile_context>

<pallas_src>
import math

import jax
import jax.numpy as jnp
from jax.experimental import pallas as pl
from jax.experimental.pallas import tpu as pltpu

SIGMA = 0.05


def _round_up(v, m):
    return (v + m - 1) // m * m


def net_forward(x, w1, b1, w2, b2, eps, *, block_b=2048):
    """Runs the Net forward pass. Returns (sampled_action, sampled_log_prob, mean).

    `mean` together with the fixed scale SIGMA stands in for the returned
    torch.distributions.Normal object, which has no Pallas-side representation.
    """
    B, n_in = x.shape
    n_hidden = w1.shape[1]
    n_out = w2.shape[1]

    # ---- batch tile selection -------------------------------------------------
    # Big tiles amortize the ~0.35 us per-grid-step overhead; sublane-align to 8.
    tb = min(block_b, _round_up(B, 8))
    # v7x megacore: for large batches keep >= 2 grid steps so both TCs get work.
    if B > 1024 and pl.cdiv(B, tb) < 2:
        tb = _round_up(pl.cdiv(B, 2), 8)
    n_steps = pl.cdiv(B, tb)

    # ---- VMEM accounting ------------------------------------------------------
    # x / eps / out blocks are lane-padded to 128 lanes in VMEM -> tb*512 B each,
    # double buffered, plus a handful of same-size temporaries (h, mean, ...).
    est_vmem = tb * 128 * 4 * (3 * 2 + 4) + 256 * 1024
    vmem_limit = None
    if est_vmem > 16 * 1024 * 1024:           # v5e's default scoped limit
        vmem_limit = min(est_vmem, 56 * 1024 * 1024)   # headroom under v7x 64 MiB

    out_w = 2 * n_out + 1                      # [ action | mean | logp ]
    logp_const = n_out * (math.log(SIGMA) + 0.5 * math.log(2.0 * math.pi))

    def kernel(x_ref, w1_ref, b1_ref, w2_ref, b2_ref, eps_ref, out_ref):
        xb = x_ref[...]                                                    # (TB, I)
        # linear1 + relu
        h = jnp.maximum(
            jnp.dot(xb, w1_ref[...], preferred_element_type=jnp.float32)
            + b1_ref[...], 0.0)                                            # (TB, H)
        # linear2 + tanh -> mean of the Normal
        mean = jnp.tanh(
            jnp.dot(h, w2_ref[...], preferred_element_type=jnp.float32)
            + b2_ref[...])                                                 # (TB, O)
        e = eps_ref[...]
        # reparameterized sample: action = mean + sigma * eps
        action = mean + SIGMA * e
        # Normal(mean, sigma).log_prob(action).sum(1):
        #   action - mean == sigma*eps  =>  -0.5*eps^2 - log(sigma) - 0.5*log(2*pi)
        logp = -0.5 * jnp.sum(e * e, axis=1, keepdims=True) - logp_const   # (TB, 1)
        # Single lane-dense(-ish) writeback: build the packed slab in registers
        # and store it once (one vst stream instead of three masked ones).
        out_ref[...] = jnp.concatenate([action, mean, logp], axis=1)       # (TB, 13)

    packed = pl.pallas_call(
        kernel,
        out_shape=jax.ShapeDtypeStruct((B, out_w), jnp.float32),
        grid=(n_steps,),
        in_specs=[
            pl.BlockSpec((tb, n_in), lambda i: (i, 0)),         # x: batch-tiled
            pl.BlockSpec((n_in, n_hidden), lambda i: (0, 0)),   # w1: VMEM-resident
            pl.BlockSpec((1, n_hidden), lambda i: (0, 0)),      # b1: VMEM-resident
            pl.BlockSpec((n_hidden, n_out), lambda i: (0, 0)),  # w2: VMEM-resident
            pl.BlockSpec((1, n_out), lambda i: (0, 0)),         # b2: VMEM-resident
            pl.BlockSpec((tb, n_out), lambda i: (i, 0)),        # eps: batch-tiled
        ],
        out_specs=pl.BlockSpec((tb, out_w), lambda i: (i, 0)),
        compiler_params=pltpu.CompilerParams(
            dimension_semantics=("parallel",),                  # megacore on v7x
            vmem_limit_bytes=vmem_limit),
    )(x.astype(jnp.float32), w1.astype(jnp.float32), b1.astype(jnp.float32),
      w2.astype(jnp.float32), b2.astype(jnp.float32), eps.astype(jnp.float32))

    # TODO(synk): a feature-major (transposed) layout with batch on the lane
    # axis would make every last dim a 128-multiple (unmasked stores, full lane
    # utilization), but only pays off if producer/consumer supply/accept that
    # layout natively — an extra wrapper transpose would cost a full HBM pass.
    action = packed[:, 0:n_out]
    mean = packed[:, n_out:2 * n_out]
    logp = packed[:, 2 * n_out:2 * n_out + 1]
    return action, logp, mean


def init_params(key, n_input, n_hidden, n_output):
    """Deterministic synthetic init (PyTorch-Linear-like uniform ranges)."""
    k1, k2, k3, k4 = jax.random.split(key, 4)
    lim1 = 1.0 / math.sqrt(n_input)
    lim2 = 1.0 / math.sqrt(n_hidden)
    # stored as (in, out) == transpose of torch's (out, in) weight
    w1 = jax.random.uniform(k1, (n_input, n_hidden), jnp.float32, -lim1, lim1)
    b1 = jax.random.uniform(k2, (1, n_hidden), jnp.float32, -lim1, lim1)
    w2 = jax.random.uniform(k3, (n_hidden, n_output), jnp.float32, -lim2, lim2)
    b2 = jax.random.uniform(k4, (1, n_output), jnp.float32, -lim2, lim2)
    return w1, b1, w2, b2


if __name__ == "__main__":
    # Small HalfCheetah-like shapes: obs dim 17, hidden 32, action dim 6.
    B, N_IN, N_HID, N_OUT = 8, 17, 32, 6

    key = jax.random.PRNGKey(0)
    k_x, k_p, k_eps = jax.random.split(key, 3)

    x = jax.random.normal(k_x, (B, N_IN), jnp.float32)
    w1, b1, w2, b2 = init_params(k_p, N_IN, N_HID, N_OUT)
    eps = jax.random.normal(k_eps, (B, N_OUT), jnp.float32)

    action, logp, mean = net_forward(x, w1, b1, w2, b2, eps)
    jax.block_until_ready((action, logp, mean))

    # Sanity check against a pure-JAX reference of the PyTorch math.
    h_ref = jnp.maximum(x @ w1 + b1, 0.0)
    mean_ref = jnp.tanh(h_ref @ w2 + b2)
    action_ref = mean_ref + SIGMA * eps
    lp_ref = (-((action_ref - mean_ref) ** 2) / (2 * SIGMA ** 2)
              - math.log(SIGMA) - 0.5 * math.log(2 * math.pi))
    logp_ref = lp_ref.sum(axis=1, keepdims=True)

    assert action.shape == (B, N_OUT) and mean.shape == (B, N_OUT)
    assert logp.shape == (B, 1)
    assert jnp.allclose(action, action_ref, atol=1e-5), "action mismatch"
    assert jnp.allclose(mean, mean_ref, atol=1e-5), "mean mismatch"
    # kernel uses the exact sigma*eps form; the reference recomputes action-mean,
    # which differs only by one fp rounding round-trip.
    assert jnp.allclose(logp, logp_ref, atol=1e-3), "log_prob mismatch"

    # TODO(synk): torch.distributions.Normal object itself has no Pallas
    # equivalent; we return (mean, fixed scale=0.05) which fully determines it.
    print("KERNEL_OK")
</pallas_src>

<mosaic_0001>
module attributes {stable_mosaic.version = 11 : i64} {
  func.func @kernel(%arg0: i32, %arg1: memref<8x17xf32, #tpu.memory_space<vmem>>, %arg2: memref<17x32xf32, #tpu.memory_space<vmem>>, %arg3: memref<1x32xf32, #tpu.memory_space<vmem>>, %arg4: memref<32x6xf32, #tpu.memory_space<vmem>>, %arg5: memref<1x6xf32, #tpu.memory_space<vmem>>, %arg6: memref<8x6xf32, #tpu.memory_space<vmem>>, %arg7: memref<8x13xf32, #tpu.memory_space<vmem>>) attributes {dimension_semantics = [#tpu.dimension_semantics<parallel>], iteration_bounds = array<i64: 1>, scalar_prefetch = 0 : i64, scratch_operands = 0 : i64, tpu.core_type = #tpu.core_type<tc>, window_params = [{transform_indices = @transform_0, window_bounds = array<i64: 8, 17>}, {pipeline_mode = #tpu.pipeline_mode<synchronous>, transform_indices = @transform_1, window_bounds = array<i64: 17, 32>}, {pipeline_mode = #tpu.pipeline_mode<synchronous>, transform_indices = @transform_2, window_bounds = array<i64: 1, 32>}, {pipeline_mode = #tpu.pipeline_mode<synchronous>, transform_indices = @transform_3, window_bounds = array<i64: 32, 6>}, {pipeline_mode = #tpu.pipeline_mode<synchronous>, transform_indices = @transform_4, window_bounds = array<i64: 1, 6>}, {transform_indices = @transform_5, window_bounds = array<i64: 8, 6>}, {transform_indices = @transform_6, window_bounds = array<i64: 8, 13>}]} {
    %c0 = arith.constant 0 : index
    %c0_0 = arith.constant 0 : index
    %0 = vector.load %arg1[%c0, %c0_0] : memref<8x17xf32, #tpu.memory_space<vmem>>, vector<8x17xf32>
    %c0_1 = arith.constant 0 : index
    %c0_2 = arith.constant 0 : index
    %1 = vector.load %arg2[%c0_1, %c0_2] : memref<17x32xf32, #tpu.memory_space<vmem>>, vector<17x32xf32>
    %cst = arith.constant dense<0.000000e+00> : vector<8x32xf32>
    %2 = tpu.matmul %0, %1, %cst {dimension_numbers = #tpu.dot_dimension_numbers<[1], [0], [0], [1], [0, 0, 1, 1], [], []>} : vector<8x17xf32>, vector<17x32xf32>, vector<8x32xf32> -> vector<8x32xf32>
    %c0_3 = arith.constant 0 : index
    %c0_4 = arith.constant 0 : index
    %3 = vector.load %arg3[%c0_3, %c0_4] : memref<1x32xf32, #tpu.memory_space<vmem>>, vector<1x32xf32>
    %4 = vector.broadcast %3 : vector<1x32xf32> to vector<8x32xf32>
    %5 = arith.addf %2, %4 : vector<8x32xf32>
    %cst_5 = arith.constant 0.000000e+00 : f32
    %6 = vector.broadcast %cst_5 : f32 to vector<8x32xf32>
    %7 = arith.maximumf %5, %6 : vector<8x32xf32>
    %c0_6 = arith.constant 0 : index
    %c0_7 = arith.constant 0 : index
    %8 = vector.load %arg4[%c0_6, %c0_7] : memref<32x6xf32, #tpu.memory_space<vmem>>, vector<32x6xf32>
    %cst_8 = arith.constant dense<0.000000e+00> : vector<8x6xf32>
    %9 = tpu.matmul %7, %8, %cst_8 {dimension_numbers = #tpu.dot_dimension_numbers<[1], [0], [0], [1], [0, 0, 1, 1], [], []>} : vector<8x32xf32>, vector<32x6xf32>, vector<8x6xf32> -> vector<8x6xf32>
    %c0_9 = arith.constant 0 : index
    %c0_10 = arith.constant 0 : index
    %10 = vector.load %arg5[%c0_9, %c0_10] : memref<1x6xf32, #tpu.memory_space<vmem>>, vector<1x6xf32>
    %11 = vector.broadcast %10 : vector<1x6xf32> to vector<8x6xf32>
    %12 = arith.addf %9, %11 : vector<8x6xf32>
    %13 = math.tanh %12 : vector<8x6xf32>
    %c0_11 = arith.constant 0 : index
    %c0_12 = arith.constant 0 : index
    %14 = vector.load %arg6[%c0_11, %c0_12] : memref<8x6xf32, #tpu.memory_space<vmem>>, vector<8x6xf32>
    %cst_13 = arith.constant 5.000000e-02 : f32
    %15 = vector.broadcast %cst_13 : f32 to vector<8x6xf32>
    %16 = arith.mulf %15, %14 : vector<8x6xf32>
    %17 = arith.addf %13, %16 : vector<8x6xf32>
    %18 = arith.mulf %14, %14 : vector<8x6xf32>
    %cst_14 = arith.constant dense<0.000000e+00> : vector<8xf32>
    %19 = vector.multi_reduction <add>, %18, %cst_14 [1] : vector<8x6xf32> to vector<8xf32>
    %20 = vector.shape_cast %19 : vector<8xf32> to vector<8x1xf32>
    %cst_15 = arith.constant -5.000000e-01 : f32
    %21 = vector.broadcast %cst_15 : f32 to vector<8x1xf32>
    %22 = arith.mulf %21, %20 : vector<8x1xf32>
    %cst_16 = arith.constant -12.460762 : f32
    %23 = vector.broadcast %cst_16 : f32 to vector<8x1xf32>
    %24 = arith.subf %22, %23 : vector<8x1xf32>
    %25 = tpu.concatenate %17, %13, %24 in 1 : vector<8x6xf32>, vector<8x6xf32>, vector<8x1xf32> -> vector<8x13xf32>
    %c0_17 = arith.constant 0 : index
    %c0_18 = arith.constant 0 : index
    %26 = vector.load %arg7[%c0_17, %c0_18] : memref<8x13xf32, #tpu.memory_space<vmem>>, vector<8x13xf32>
    tpu.vector_store %arg7[%c0_17, %c0_18], %25 {strides = array<i32>} : memref<8x13xf32, #tpu.memory_space<vmem>>, vector<8x13xf32>,
    return
  }
  func.func @transform_0(%arg0: i32) -> (i32, i32) {
    %c0_i32 = arith.constant 0 : i32
    %c0_i32_0 = arith.constant 0 : i32
    return %arg0, %c0_i32 : i32, i32
  }
  func.func @transform_1(%arg0: i32) -> (i32, i32) {
    %c0_i32 = arith.constant 0 : i32
    %c0_i32_0 = arith.constant 0 : i32
    %c0_i32_1 = arith.constant 0 : i32
    return %c0_i32, %c0_i32_0 : i32, i32
  }
  func.func @transform_2(%arg0: i32) -> (i32, i32) {
    %c0_i32 = arith.constant 0 : i32
    %c0_i32_0 = arith.constant 0 : i32
    %c0_i32_1 = arith.constant 0 : i32
    return %c0_i32, %c0_i32_0 : i32, i32
  }
  func.func @transform_3(%arg0: i32) -> (i32, i32) {
    %c0_i32 = arith.constant 0 : i32
    %c0_i32_0 = arith.constant 0 : i32
    %c0_i32_1 = arith.constant 0 : i32
    return %c0_i32, %c0_i32_0 : i32, i32
  }
  func.func @transform_4(%arg0: i32) -> (i32, i32) {
    %c0_i32 = arith.constant 0 : i32
    %c0_i32_0 = arith.constant 0 : i32
    %c0_i32_1 = arith.constant 0 : i32
    return %c0_i32, %c0_i32_0 : i32, i32
  }
  func.func @transform_5(%arg0: i32) -> (i32, i32) {
    %c0_i32 = arith.constant 0 : i32
    %c0_i32_0 = arith.constant 0 : i32
    return %arg0, %c0_i32 : i32, i32
  }
  func.func @transform_6(%arg0: i32) -> (i32, i32) {
    %c0_i32 = arith.constant 0 : i32
    %c0_i32_0 = arith.constant 0 : i32
    return %arg0, %c0_i32 : i32, i32
  }
}

</mosaic_0001>

<llo_original>
// kernel: tpu_custom_call.1
$region0: #{tpu_custom_call.1}
  #allocation0 [shape = 'u32[]', space=smem, size = 0x4, offset = 0x4, fixed_abs, tag = 'smem constant byte address 0x4 - core index']
  #allocation1 [shape = 'u32[144,128]{1,0:T(1,128)}', space=vmem, size = 0x12000, scoped, tag = 'internal scratch']
  %s0 = inlined_call_operand.vmem [shape: f32[8,17], index: 0, kind: input, shape index: {}]
  %s1 = inlined_call_operand.vmem [shape: f32[17,32], index: 1, kind: input, shape index: {}]
  %s2 = inlined_call_operand.vmem [shape: f32[1,32], index: 2, kind: input, shape index: {}]
  %s3 = inlined_call_operand.vmem [shape: f32[32,6], index: 3, kind: input, shape index: {}]
  %s4 = inlined_call_operand.vmem [shape: f32[1,6], index: 4, kind: input, shape index: {}]
  %s5 = inlined_call_operand.vmem [shape: f32[8,6], index: 5, kind: input, shape index: {}]
  %s6 = inlined_call_operand.hbm [shape: f32[8,13], index: 6, kind: output, shape index: {}]
  %s7 = sld [smem:[#allocation0]]
  $region34: #{tpu_custom_call.1} parent=0
    _
  %s9 = ssub.s32 1, %s7
  %s10 = scalar_select 0, %s9, %s7
  $region1: #{tpu_custom_call.1} parent=0
    #allocation2 [shape = 'u8[4096]{0}', space=vmem, size = 0x1000, scoped, tag = 'output window, operand 0, single buffered']
    #allocation3 [shape = 's32[1]{0}', space=sflag, size = 0x4, scoped, tag = 'scoped memory for tpu_custom_call.1']
    %11 = vsyncpa [#allocation3], 0
    // Predicated region
    $region2: #{tpu_custom_call.1} parent=1 // pred_check
      _
    $region3: #{tpu_custom_call.1} parent=1 // pred_check_branch
      %13 = sbr.rel (0) target = $region5
    $region4: #{tpu_custom_call.1} parent=1 // pred_region
      _
    $region5: #{tpu_custom_call.1} parent=1 // pred_fallthru
      _
    // Predicated region
    $region6: #{tpu_custom_call.1} parent=1 // pred_check
      _
    $region7: #{tpu_custom_call.1} parent=1 // pred_check_branch
      %15 = sbr.rel (0) target = $region9
    $region8: #{tpu_custom_call.1} parent=1 // pred_region
      _
    $region9: #{tpu_custom_call.1} parent=1 // pred_fallthru
      _
    // Predicated region
    $region10: #{tpu_custom_call.1} parent=1 // pred_check
      _
    $region11: #{tpu_custom_call.1} parent=1 // pred_check_branch
      %17 = sbr.rel (0) target = $region13
    $region12: #{tpu_custom_call.1} parent=1 // pred_region
      _
    $region13: #{tpu_custom_call.1} parent=1 // pred_fallthru
      _
    // Predicated region
    $region14: #{tpu_custom_call.1} parent=1 // pred_check
      _
    $region15: #{tpu_custom_call.1} parent=1 // pred_check_branch
      %19 = sbr.rel (0) target = $region17
    $region16: #{tpu_custom_call.1} parent=1 // pred_region
      _
    $region17: #{tpu_custom_call.1} parent=1 // pred_fallthru
      _
    // Predicated region
    $region18: #{tpu_custom_call.1} parent=1 // pred_check
      _
    $region19: #{tpu_custom_call.1} parent=1 // pred_check_branch
      %21 = sbr.rel (0) target = $region21
    $region20: #{tpu_custom_call.1} parent=1 // pred_region
      _
    $region21: #{tpu_custom_call.1} parent=1 // pred_fallthru
      _
    // Predicated region
    $region22: #{tpu_custom_call.1} parent=1 // pred_check
      _
    $region23: #{tpu_custom_call.1} parent=1 // pred_check_branch
      %23 = sbr.rel (0) target = $region25
    $region24: #{tpu_custom_call.1} parent=1 // pred_region
      _
    $region25: #{tpu_custom_call.1} parent=1 // pred_fallthru
      _
    %v24 = vld [vmem:[%s0] sm:$0xff]
    %v25 = vld [vmem:[%s1] sm:$0xff]
    %v26 = vld [vmem:[%s1 + $0x8] sm:$0xff]
    %v27 = vld [vmem:[%s1 + $0x10] sm:$0x1]
    %v28 = vld [vmem:[%s2] sm:$0x1]
    %v30 = vlaneseq
    %v31 = vshrl.u32 %v30, 7
    %v32 = vsub.s32 0, %v31
    %v33 = vrot.slane %v28, %v32
    %vm35 = vcmask 138240
    %v37 = vsel %vm35, %v24, 0
    %vm39 = vcmask 1040384
    %v41 = vsel %vm39, %v27, 0
    %43 = vmatprep.subr.mxu0 0.0
    %44 = vmatpush1.msra.mxu0 %v25
    %45 = vmatprep.subr.mxu0 0.0
    %46 = vmatpush1.msra.mxu0 %v26
    %47 = vmatprep.subr.mxu0 0.0
    %48 = vmatpush1.msra.mxu0 %v41
    %49 = vmatprep.subr.mxu0 0.0
    %50 = vmatpush1.msra.mxu0 0.0
    %51 = vmatprep.subr.mxu0 0.0
    %52 = vmatpush1.msra.mxu0 0.0
    %53 = vmatprep.subr.mxu0 0.0
    %54 = vmatpush1.msra.mxu0 0.0
    %55 = vmatprep.subr.mxu0 0.0
    %56 = vmatpush1.msra.mxu0 0.0
    %57 = vmatprep.subr.mxu0 0.0
    %58 = vmatpush1.msra.mxu0 0.0
    %59 = vmatprep.subr.mxu0 0.0
    %60 = vmatpush1.msra.mxu0 0.0
    %61 = vmatprep.subr.mxu0 0.0
    %62 = vmatpush1.msra.mxu0 0.0
    %63 = vmatprep.subr.mxu0 0.0
    %64 = vmatpush1.msra.mxu0 0.0
    %65 = vmatprep.subr.mxu0 0.0
    %66 = vmatpush1.msra.mxu0 0.0
    %67 = vmatprep.subr.mxu0 0.0
    %68 = vmatpush1.msra.mxu0 0.0
    %69 = vmatprep.subr.mxu0 0.0
    %70 = vmatpush1.msra.mxu0 0.0
    %71 = vmatprep.subr.mxu0 0.0
    %72 = vmatpush1.msra.mxu0 0.0
    %73 = vmatprep.subr.mxu0 0.0
    %74 = vmatpush1.msra.mxu0 0.0
    %75 = vmatprep.subr.mxu0 0.0
    %76 = vmatpush1.msra.mxu0 0.0
    %77 = vmatprep.subr.mxu0 0.0
    %78 = vmatpush1.msra.mxu0 0.0
    %79 = vmatprep.subr.mxu0 0.0
    %80 = vmatpush1.msra.mxu0 0.0
    %81 = vmatprep.subr.mxu0 0.0
    %82 = vmatpush1.msra.mxu0 0.0
    %83 = vmatprep.subr.mxu0 0.0
    %84 = vmatpush1.msra.mxu0 0.0
    %85 = vmatprep.subr.mxu0 0.0
    %86 = vmatpush1.msra.mxu0 0.0
    %87 = vmatprep.subr.mxu0 0.0
    %88 = vmatpush1.msra.mxu0 0.0
    %89 = vmatprep.subr.mxu0 0.0
    %90 = vmatpush1.msra.mxu0 0.0
    %91 = vmatprep.subr.mxu0 0.0
    %92 = vmatpush1.msra.mxu0 0.0
    %93 = vmatprep.subr.mxu0 0.0
    %94 = vmatpush1.msra.mxu0 0.0
    %95 = vmatprep.subr.mxu0 0.0
    %96 = vmatpush1.msra.mxu0 0.0
    %97 = vmatprep.subr.mxu0 0.0
    %98 = vmatpush1.msra.mxu0 0.0
    %99 = vmatprep.subr.mxu0 0.0
    %100 = vmatpush1.msra.mxu0 0.0
    %101 = vmatprep.subr.mxu0 0.0
    %102 = vmatpush1.msra.mxu0 0.0
    %103 = vmatprep.subr.mxu0 0.0
    %104 = vmatpush1.msra.mxu0 0.0
    %105 = vmatprep.subr.mxu0 0.0
    %106 = vmatpush1.msra.mxu0 0.0
    %107 = vmatprep.mubr.f32.mxu0 0.0
    %108 = vmatmul.mubr.f32.gmra.mrb[0].mxu0 %v37
    %v109 = vpop.f32.mrb[0].mxu0
    %v110 = vadd.f32 %v33, %v109
    %v111 = vpop.f32.mrb[0].mxu0
    %112 = vdwg.mxu0
    %v113 = vmax.f32 %v110, 0.0
    %v114 = vld [vmem:[%s3] sm:$0xff]
    %v115 = vld [vmem:[%s3 + $0x8] sm:$0xff]
    %v116 = vld [vmem:[%s3 + $0x10] sm:$0xff]
    %v117 = vld [vmem:[%s3 + $0x18] sm:$0xff]
    %v118 = vld [vmem:[%s4] sm:$0x1]
    %v120 = vlaneseq
    %v121 = vshrl.u32 %v120, 7
    %v122 = vsub.s32 0, %v121
    %v123 = vrot.slane %v118, %v122
    %vm125 = vcmask 261120
    %v127 = vsel %vm125, %v113, 0
    %129 = vmatprep.subr.mxu0 0.0
    %130 = vmatpush1.msra.mxu0 %v114
    %131 = vmatprep.subr.mxu0 0.0
    %132 = vmatpush1.msra.mxu0 %v115
    %133 = vmatprep.subr.mxu0 0.0
    %134 = vmatpush1.msra.mxu0 %v116
    %135 = vmatprep.subr.mxu0 0.0
    %136 = vmatpush1.msra.mxu0 %v117
    %137 = vmatprep.subr.mxu0 0.0
    %138 = vmatpush1.msra.mxu0 0.0
    %139 = vmatprep.subr.mxu0 0.0
    %140 = vmatpush1.msra.mxu0 0.0
    %141 = vmatprep.subr.mxu0 0.0
    %142 = vmatpush1.msra.mxu0 0.0
    %143 = vmatprep.subr.mxu0 0.0
    %144 = vmatpush1.msra.mxu0 0.0
    %145 = vmatprep.subr.mxu0 0.0
    %146 = vmatpush1.msra.mxu0 0.0
    %147 = vmatprep.subr.mxu0 0.0
    %148 = vmatpush1.msra.mxu0 0.0
    %149 = vmatprep.subr.mxu0 0.0
    %150 = vmatpush1.msra.mxu0 0.0
    %151 = vmatprep.subr.mxu0 0.0
    %152 = vmatpush1.msra.mxu0 0.0
    %153 = vmatprep.subr.mxu0 0.0
    %154 = vmatpush1.msra.mxu0 0.0
    %155 = vmatprep.subr.mxu0 0.0
    %156 = vmatpush1.msra.mxu0 0.0
    %157 = vmatprep.subr.mxu0 0.0
    %158 = vmatpush1.msra.mxu0 0.0
    %159 = vmatprep.subr.mxu0 0.0
    %160 = vmatpush1.msra.mxu0 0.0
    %161 = vmatprep.subr.mxu0 0.0
    %162 = vmatpush1.msra.mxu0 0.0
    %163 = vmatprep.subr.mxu0 0.0
    %164 = vmatpush1.msra.mxu0 0.0
    %165 = vmatprep.subr.mxu0 0.0
    %166 = vmatpush1.msra.mxu0 0.0
    %167 = vmatprep.subr.mxu0 0.0
    %168 = vmatpush1.msra.mxu0 0.0
    %169 = vmatprep.subr.mxu0 0.0
    %170 = vmatpush1.msra.mxu0 0.0
    %171 = vmatprep.subr.mxu0 0.0
    %172 = vmatpush1.msra.mxu0 0.0
    %173 = vmatprep.subr.mxu0 0.0
    %174 = vmatpush1.msra.mxu0 0.0
    %175 = vmatprep.subr.mxu0 0.0
    %176 = vmatpush1.msra.mxu0 0.0
    %177 = vmatprep.subr.mxu0 0.0
    %178 = vmatpush1.msra.mxu0 0.0
    %179 = vmatprep.subr.mxu0 0.0
    %180 = vmatpush1.msra.mxu0 0.0
    %181 = vmatprep.subr.mxu0 0.0
    %182 = vmatpush1.msra.mxu0 0.0
    %183 = vmatprep.subr.mxu0 0.0
    %184 = vmatpush1.msra.mxu0 0.0
    %185 = vmatprep.subr.mxu0 0.0
    %186 = vmatpush1.msra.mxu0 0.0
    %187 = vmatprep.subr.mxu0 0.0
    %188 = vmatpush1.msra.mxu0 0.0
    %189 = vmatprep.subr.mxu0 0.0
    %190 = vmatpush1.msra.mxu0 0.0
    %191 = vmatprep.subr.mxu0 0.0
    %192 = vmatpush1.msra.mxu0 0.0
    %193 = vmatprep.mubr.f32.mxu0 0.0
    %194 = vmatmul.mubr.f32.gmra.mrb[0].mxu0 %v127
    %v195 = vpop.f32.mrb[0].mxu0
    %v196 = vadd.f32 %v123, %v195
    %v197 = vpop.f32.mrb[0].mxu0
    %198 = vdwg.mxu0
    %v199 = vtanh.pop %v196
    %v200 = vld [vmem:[%s5] sm:$0xff]
    %v201 = vmul.f32 %v200, 0.05
    %v202 = vadd.f32 %v199, %v201
    %v203 = vmul.f32 %v200, %v200
    %vm204 = vcmask 48128
    %v205 = vsel %vm204, %v203, 0.0
    %206 = vadd.xlane.f32.xlu0 %v205
    %v207 = vpop.xlane.xlu0 %206
    %v208 = vmul.f32 %v207, -0.5
    %v209 = vsub.f32 %v208, -12.460762
    %211 = vrot.lane.b32.xlu0 %v199, 6
    %v212 = vpop.permute.xlu0 %211
    %v214 = vsel %vm204, %v202, %v212
    %vm215 = vcmask 97280
    %v216 = vsel %vm215, %v214, %v209
    %vm217 = vcmask 105472
    %218 = vst.msk [vmem:[#allocation2] sm:$0xff] %vm217, %v216
    // Predicated region
    $region26: #{tpu_custom_call.1} parent=1 // pred_check
      _
    $region27: #{tpu_custom_call.1} parent=1 // pred_check_branch
      %220 = sbr.rel (0) target = $region29
    $region28: #{tpu_custom_call.1} parent=1 // pred_region
      %s222 = ssub.s32 128, 128
      %223 = vsyncadd [#allocation3], %s222
      %s225 = sshll.u32 [#allocation2], 4
      %s226 = int_to_ptr.vmem [resolvable:$true] %s225
      %228 = dma.vmem_to_hbm [thread:$0]  %s226, 128, %s6, [#allocation3]
    $region29: #{tpu_custom_call.1} parent=1 // pred_fallthru
      _
    // Predicated region
    $region30: #{tpu_custom_call.1} parent=1 // pred_check
      _
    $region31: #{tpu_custom_call.1} parent=1 // pred_check_branch
      %230 = sbr.rel (0) target = $region33
    $region32: #{tpu_custom_call.1} parent=1 // pred_region
      %231 = dma.done [#allocation3], 128
    $region33: #{tpu_custom_call.1} parent=1 // pred_fallthru
      _
    %232 = vsyncpa [#allocation3], 1

</llo_original>
